<compile_context>
chip_gen: v7x
topology: tpu7x:2x2x1
jax: 0.10.0
libtpu: 0.0.40
codegen_flags: <defaults>
</compile_context>

<pallas_src>
import jax
import jax.numpy as jnp
from jax.experimental import pallas as pl
from jax.experimental.pallas import tpu as pltpu


LANES = 128       # lane width: hidden widths 64/32/16/2 are zero-padded to this
N_OUT = 2         # final logits width (module: Linear(16, 2) + Sigmoid)
MAX_TB = 2048     # max batch rows per block; double-buffered input stays well
                  # inside v5e's 16 MiB default scoped VMEM even at H=768


def _round_up(x, m):
    return (x + m - 1) // m * m


def mlp_head_kernel(cls_ref, w1_ref, w_ref, b_ref, out_ref):
    """Fused 4-layer MLP head on one TB-row block of CLS embeddings.

    cls_ref: (TB, H)        bf16   streaming batch block
    w1_ref:  (H, 128)       bf16   layer-1 weight, lane-padded 64 -> 128
    w_ref:   (3, 128, 128)  bf16   layers 2..4 weights, zero-padded
    b_ref:   (4, 128)       f32    all biases, lane zero-padded
    out_ref: (TB, 2)        f32    raw logits (sigmoid applied in the wrapper)

    Matmuls run on the MXU with bf16 operands and f32 accumulation; bias-add
    and ReLU run on the VPU in f32 on full 128-lane slabs.
    """
    b = b_ref[...]                                                   # (4, 128)

    # Layer 1: H -> 128 (cols 0..63 real), ReLU
    h = jnp.dot(cls_ref[...], w1_ref[...],
                preferred_element_type=jnp.float32) + b[0:1, :]
    h = jnp.maximum(h, 0.0)

    # Layers 2, 3: 128 -> 128 (zero-padded widths 32 / 16), ReLU
    for l in range(2):
        h = jnp.dot(h.astype(jnp.bfloat16), w_ref[l],
                    preferred_element_type=jnp.float32) + b[l + 1:l + 2, :]
        h = jnp.maximum(h, 0.0)

    # Layer 4: 128 -> 128 (cols 0..1 real), raw logits
    h = jnp.dot(h.astype(jnp.bfloat16), w_ref[2],
                preferred_element_type=jnp.float32) + b[3:4, :]

    out_ref[...] = h[:, :out_ref.shape[1]]                 # narrow logit store


def _batch_tiling(B):
    """Pick block rows TB and padded batch B_pad.

    Big blocks amortize per-step overhead; >= 2 blocks (when B >= 16) lets v7x
    shard the parallel batch axis across its 2 TensorCores; deriving TB from
    ceil(B / nblocks) bounds padding waste (< 8 rows for B <= 2 * MAX_TB).
    """
    nblocks = pl.cdiv(B, MAX_TB)
    if B >= 16:
        nblocks = max(nblocks, 2)
    TB = min(MAX_TB, _round_up(pl.cdiv(B, nblocks), 8))
    B_pad = _round_up(B, TB)
    return TB, B_pad


def mlp_head_logits(cls_emb, packed):
    """(B, H) CLS embeddings -> (B, 2) raw logits via the Pallas head kernel."""
    w1p, w_slab, b_slab = packed
    B, H = cls_emb.shape
    TB, B_pad = _batch_tiling(B)

    x = cls_emb.astype(jnp.bfloat16)         # halves HBM traffic into the kernel
    if B_pad != B:
        x = jnp.pad(x, ((0, B_pad - B), (0, 0)))

    logits = pl.pallas_call(
        mlp_head_kernel,
        out_shape=jax.ShapeDtypeStruct((B_pad, N_OUT), jnp.float32),
        grid_spec=pltpu.PrefetchScalarGridSpec(
            num_scalar_prefetch=0,
            grid=(B_pad // TB,),
            in_specs=[
                pl.BlockSpec((TB, H), lambda i: (i, 0)),       # cls rows stream
                pl.BlockSpec(w1p.shape, lambda i: (0, 0)),     # VMEM-resident
                pl.BlockSpec(w_slab.shape, lambda i: (0, 0, 0)),
                pl.BlockSpec(b_slab.shape, lambda i: (0, 0)),
            ],
            out_specs=pl.BlockSpec((TB, N_OUT), lambda i: (i, 0)),
        ),
        compiler_params=pltpu.CompilerParams(
            # batch blocks are independent -> shard across TCs (v7x megacore)
            dimension_semantics=("parallel",),
        ),
    )(x, w1p, w_slab, b_slab)

    return logits[:B]


def init_head_params(key, hidden_dim, hidden_units=(64, 32, 16), n_out=N_OUT):
    """f32 init of the 4 Linear layers, (in_features, out_features) layout,
    matching torch's y = x @ W.T + b semantics and default init bound."""
    dims = [hidden_dim, *hidden_units, n_out]
    params = []
    for i in range(len(dims) - 1):
        fan_in, fan_out = dims[i], dims[i + 1]
        key, kw, kb = jax.random.split(key, 3)
        bound = 1.0 / jnp.sqrt(fan_in)
        w = jax.random.uniform(kw, (fan_in, fan_out), jnp.float32, -bound, bound)
        b = jax.random.uniform(kb, (fan_out,), jnp.float32, -bound, bound)
        params.append((w, b))
    return params


def prepare_head_params(params):
    """One-time (init-time) packing for the kernel: lane-pad every layer width
    to 128, cast weights to bf16 (MXU-native), stack layers 2..4 into a single
    weight slab and all 4 biases into one f32 slab.  Zero padding keeps the
    math exact."""
    (w1, b1), *rest = params
    H = w1.shape[0]
    w1p = (jnp.zeros((H, LANES), jnp.float32)
           .at[:, :w1.shape[1]].set(w1).astype(jnp.bfloat16))
    w_slab = jnp.zeros((len(rest), LANES, LANES), jnp.float32)
    b_slab = jnp.zeros((len(params), LANES), jnp.float32).at[0, :b1.shape[0]].set(b1)
    for l, (w, b) in enumerate(rest):
        w_slab = w_slab.at[l, :w.shape[0], :w.shape[1]].set(w)
        b_slab = b_slab.at[l + 1, :b.shape[0]].set(b)
    return w1p, w_slab.astype(jnp.bfloat16), b_slab


def synthetic_bert_backbone(key, input_ids, attention_masks, hidden_dim,
                            vocab_size=100):
    """Stand-in for self.model(...): deterministic last_hidden_state (B, S, H).
    Plain-JAX glue, not part of the Pallas hot path."""
    emb_table = jax.random.normal(key, (vocab_size, hidden_dim), jnp.float32) * 0.02
    last_hidden = emb_table[input_ids]                       # (B, S, H)
    last_hidden = last_hidden * attention_masks[..., None]   # mask (no-op on CLS)
    return last_hidden


def custom_bert_forward(input_ids, attention_masks, backbone_key, packed_head,
                        hidden_dim):
    # outputs[0][:, 0, :] -> CLS token embedding.  The slice stays in XLA so it
    # fuses into the backbone gather; only (B, H) bf16 rows feed the kernel.
    last_hidden = synthetic_bert_backbone(backbone_key, input_ids,
                                          attention_masks.astype(jnp.float32),
                                          hidden_dim)
    cls = last_hidden[:, 0, :]                               # (B, H)
    logits = mlp_head_logits(cls, packed_head)               # (B, 2) raw logits
    # Sigmoid on the tiny sliced result (fuses under jit); keeps transcendental
    # work out of the bandwidth-bound kernel.
    return jax.nn.sigmoid(logits)


def head_reference(cls_emb, params):
    """Plain-JAX f32 reference of the head (weights bf16-rounded to match the
    kernel's stored precision), for correctness checking."""
    x = cls_emb.astype(jnp.float32)
    *hidden, (w4, b4) = params
    for w, b in hidden:
        w = w.astype(jnp.bfloat16).astype(jnp.float32)
        x = jnp.maximum(x @ w + b, 0.0)
    w4 = w4.astype(jnp.bfloat16).astype(jnp.float32)
    return jax.nn.sigmoid(x @ w4 + b4)


if __name__ == "__main__":
    B, S, H = 8, 16, 128   # small shapes: batch=8, seq=16, hidden=128
    key = jax.random.PRNGKey(0)
    k_ids, k_backbone, k_head = jax.random.split(key, 3)

    input_ids = jax.random.randint(k_ids, (B, S), 0, 100, dtype=jnp.int32)
    attention_masks = jnp.ones((B, S), dtype=jnp.int32)

    head_params = init_head_params(k_head, hidden_dim=H)
    packed_head = jax.block_until_ready(prepare_head_params(head_params))

    forward = jax.jit(custom_bert_forward, static_argnames=("hidden_dim",))
    out = forward(input_ids, attention_masks, k_backbone, packed_head,
                  hidden_dim=H)
    out = jax.block_until_ready(out)

    assert out.shape == (B, 2), out.shape
    assert bool(jnp.all((out >= 0.0) & (out <= 1.0)))  # sigmoid range check

    # Compare against a plain-JAX f32 reference (loose tol for bf16 MXU path).
    last_hidden = synthetic_bert_backbone(k_backbone, input_ids,
                                          attention_masks.astype(jnp.float32), H)
    ref = head_reference(last_hidden[:, 0, :], head_params)
    assert bool(jnp.allclose(out, ref, atol=3e-2)), (out, ref)

    print("KERNEL_OK")
</pallas_src>

<mosaic_0001>
module attributes {stable_mosaic.version = 11 : i64} {
  func.func @mlp_head_kernel(%arg0: i32, %arg1: memref<8x128xbf16, #tpu.memory_space<vmem>>, %arg2: memref<128x128xbf16, #tpu.memory_space<vmem>>, %arg3: memref<3x128x128xbf16, #tpu.memory_space<vmem>>, %arg4: memref<4x128xf32, #tpu.memory_space<vmem>>, %arg5: memref<8x2xf32, #tpu.memory_space<vmem>>) attributes {dimension_semantics = [#tpu.dimension_semantics<parallel>], iteration_bounds = array<i64: 1>, scalar_prefetch = 0 : i64, scratch_operands = 0 : i64, tpu.core_type = #tpu.core_type<tc>, window_params = [{transform_indices = @transform_0, window_bounds = array<i64: 8, 128>}, {pipeline_mode = #tpu.pipeline_mode<synchronous>, transform_indices = @transform_1, window_bounds = array<i64: 128, 128>}, {pipeline_mode = #tpu.pipeline_mode<synchronous>, transform_indices = @transform_2, window_bounds = array<i64: 3, 128, 128>}, {pipeline_mode = #tpu.pipeline_mode<synchronous>, transform_indices = @transform_3, window_bounds = array<i64: 4, 128>}, {transform_indices = @transform_4, window_bounds = array<i64: 8, 2>}]} {
    %c0 = arith.constant 0 : index
    %c0_0 = arith.constant 0 : index
    %0 = vector.load %arg4[%c0, %c0_0] : memref<4x128xf32, #tpu.memory_space<vmem>>, vector<4x128xf32>
    %c0_1 = arith.constant 0 : index
    %c0_2 = arith.constant 0 : index
    %1 = vector.load %arg1[%c0_1, %c0_2] : memref<8x128xbf16, #tpu.memory_space<vmem>>, vector<8x128xbf16>
    %c0_3 = arith.constant 0 : index
    %c0_4 = arith.constant 0 : index
    %2 = vector.load %arg2[%c0_3, %c0_4] : memref<128x128xbf16, #tpu.memory_space<vmem>>, vector<128x128xbf16>
    %cst = arith.constant dense<0.000000e+00> : vector<8x128xf32>
    %3 = tpu.matmul %1, %2, %cst {dimension_numbers = #tpu.dot_dimension_numbers<[1], [0], [0], [1], [0, 0, 1, 1], [], []>} : vector<8x128xbf16>, vector<128x128xbf16>, vector<8x128xf32> -> vector<8x128xf32>
    %4 = vector.extract_strided_slice %0 {offsets = [0, 0], sizes = [1, 128], strides = [1, 1]} : vector<4x128xf32> to vector<1x128xf32>
    %5 = vector.broadcast %4 : vector<1x128xf32> to vector<8x128xf32>
    %6 = arith.addf %3, %5 : vector<8x128xf32>
    %cst_5 = arith.constant 0.000000e+00 : f32
    %7 = vector.broadcast %cst_5 : f32 to vector<8x128xf32>
    %8 = arith.maximumf %6, %7 : vector<8x128xf32>
    %9 = arith.truncf %8 : vector<8x128xf32> to vector<8x128xbf16>
    %c0_6 = arith.constant 0 : index
    %c0_7 = arith.constant 0 : index
    %c0_8 = arith.constant 0 : index
    %10 = vector.load %arg3[%c0_6, %c0_7, %c0_8] : memref<3x128x128xbf16, #tpu.memory_space<vmem>>, vector<1x128x128xbf16>
    %11 = vector.shape_cast %10 : vector<1x128x128xbf16> to vector<128x128xbf16>
    %cst_9 = arith.constant dense<0.000000e+00> : vector<8x128xf32>
    %12 = tpu.matmul %9, %11, %cst_9 {dimension_numbers = #tpu.dot_dimension_numbers<[1], [0], [0], [1], [0, 0, 1, 1], [], []>} : vector<8x128xbf16>, vector<128x128xbf16>, vector<8x128xf32> -> vector<8x128xf32>
    %13 = vector.extract_strided_slice %0 {offsets = [1, 0], sizes = [1, 128], strides = [1, 1]} : vector<4x128xf32> to vector<1x128xf32>
    %14 = vector.broadcast %13 : vector<1x128xf32> to vector<8x128xf32>
    %15 = arith.addf %12, %14 : vector<8x128xf32>
    %cst_10 = arith.constant 0.000000e+00 : f32
    %16 = vector.broadcast %cst_10 : f32 to vector<8x128xf32>
    %17 = arith.maximumf %15, %16 : vector<8x128xf32>
    %18 = arith.truncf %17 : vector<8x128xf32> to vector<8x128xbf16>
    %c1 = arith.constant 1 : index
    %c0_11 = arith.constant 0 : index
    %c0_12 = arith.constant 0 : index
    %19 = vector.load %arg3[%c1, %c0_11, %c0_12] : memref<3x128x128xbf16, #tpu.memory_space<vmem>>, vector<1x128x128xbf16>
    %20 = vector.shape_cast %19 : vector<1x128x128xbf16> to vector<128x128xbf16>
    %cst_13 = arith.constant dense<0.000000e+00> : vector<8x128xf32>
    %21 = tpu.matmul %18, %20, %cst_13 {dimension_numbers = #tpu.dot_dimension_numbers<[1], [0], [0], [1], [0, 0, 1, 1], [], []>} : vector<8x128xbf16>, vector<128x128xbf16>, vector<8x128xf32> -> vector<8x128xf32>
    %22 = vector.extract_strided_slice %0 {offsets = [2, 0], sizes = [1, 128], strides = [1, 1]} : vector<4x128xf32> to vector<1x128xf32>
    %23 = vector.broadcast %22 : vector<1x128xf32> to vector<8x128xf32>
    %24 = arith.addf %21, %23 : vector<8x128xf32>
    %cst_14 = arith.constant 0.000000e+00 : f32
    %25 = vector.broadcast %cst_14 : f32 to vector<8x128xf32>
    %26 = arith.maximumf %24, %25 : vector<8x128xf32>
    %27 = arith.truncf %26 : vector<8x128xf32> to vector<8x128xbf16>
    %c2 = arith.constant 2 : index
    %c0_15 = arith.constant 0 : index
    %c0_16 = arith.constant 0 : index
    %28 = vector.load %arg3[%c2, %c0_15, %c0_16] : memref<3x128x128xbf16, #tpu.memory_space<vmem>>, vector<1x128x128xbf16>
    %29 = vector.shape_cast %28 : vector<1x128x128xbf16> to vector<128x128xbf16>
    %cst_17 = arith.constant dense<0.000000e+00> : vector<8x128xf32>
    %30 = tpu.matmul %27, %29, %cst_17 {dimension_numbers = #tpu.dot_dimension_numbers<[1], [0], [0], [1], [0, 0, 1, 1], [], []>} : vector<8x128xbf16>, vector<128x128xbf16>, vector<8x128xf32> -> vector<8x128xf32>
    %31 = vector.extract_strided_slice %0 {offsets = [3, 0], sizes = [1, 128], strides = [1, 1]} : vector<4x128xf32> to vector<1x128xf32>
    %32 = vector.broadcast %31 : vector<1x128xf32> to vector<8x128xf32>
    %33 = arith.addf %30, %32 : vector<8x128xf32>
    %34 = vector.extract_strided_slice %33 {offsets = [0, 0], sizes = [8, 2], strides = [1, 1]} : vector<8x128xf32> to vector<8x2xf32>
    %c0_18 = arith.constant 0 : index
    %c0_19 = arith.constant 0 : index
    %35 = vector.load %arg5[%c0_18, %c0_19] : memref<8x2xf32, #tpu.memory_space<vmem>>, vector<8x2xf32>
    tpu.vector_store %arg5[%c0_18, %c0_19], %34 {strides = array<i32>} : memref<8x2xf32, #tpu.memory_space<vmem>>, vector<8x2xf32>,
    return
  }
  func.func @transform_0(%arg0: i32) -> (i32, i32) {
    %c0_i32 = arith.constant 0 : i32
    %c0_i32_0 = arith.constant 0 : i32
    return %arg0, %c0_i32 : i32, i32
  }
  func.func @transform_1(%arg0: i32) -> (i32, i32) {
    %c0_i32 = arith.constant 0 : i32
    %c0_i32_0 = arith.constant 0 : i32
    %c0_i32_1 = arith.constant 0 : i32
    return %c0_i32, %c0_i32_0 : i32, i32
  }
  func.func @transform_2(%arg0: i32) -> (i32, i32, i32) {
    %c0_i32 = arith.constant 0 : i32
    %c0_i32_0 = arith.constant 0 : i32
    %c0_i32_1 = arith.constant 0 : i32
    %c0_i32_2 = arith.constant 0 : i32
    return %c0_i32, %c0_i32_0, %c0_i32_1 : i32, i32, i32
  }
  func.func @transform_3(%arg0: i32) -> (i32, i32) {
    %c0_i32 = arith.constant 0 : i32
    %c0_i32_0 = arith.constant 0 : i32
    %c0_i32_1 = arith.constant 0 : i32
    return %c0_i32, %c0_i32_0 : i32, i32
  }
  func.func @transform_4(%arg0: i32) -> (i32, i32) {
    %c0_i32 = arith.constant 0 : i32
    %c0_i32_0 = arith.constant 0 : i32
    return %arg0, %c0_i32 : i32, i32
  }
}

</mosaic_0001>

<llo_original>
// kernel: custom_bert_forward.1
$region0: #{custom_bert_forward.1}
  #allocation0 [shape = 'u32[]', space=smem, size = 0x4, offset = 0x4, fixed_abs, tag = 'smem constant byte address 0x4 - core index']
  #allocation1 [shape = 'u32[144,128]{1,0:T(1,128)}', space=vmem, size = 0x12000, scoped, tag = 'internal scratch']
  %s0 = inlined_call_operand.vmem [shape: bf16[8,128], index: 0, kind: input, shape index: {}]
  %s1 = inlined_call_operand.vmem [shape: bf16[128,128], index: 1, kind: input, shape index: {}]
  %s2 = inlined_call_operand.vmem [shape: bf16[3,128,128], index: 2, kind: input, shape index: {}]
  %s3 = inlined_call_operand.vmem [shape: f32[4,128], index: 3, kind: input, shape index: {}]
  %s4 = inlined_call_operand.vmem [shape: f32[8,2], index: 4, kind: output, shape index: {}]
  %s5 = sld [smem:[#allocation0]]
  $region26: #{custom_bert_forward.1} parent=0
    _
  %s7 = ssub.s32 1, %s5
  %s8 = scalar_select 0, %s7, %s5
  // Predicated region
  $region2: #{custom_bert_forward.1} parent=0 // pred_check
    _
  $region3: #{custom_bert_forward.1} parent=0 // pred_check_branch
    %10 = sbr.rel (0) target = $region5
  $region4: #{custom_bert_forward.1} parent=0 // pred_region
    _
  $region5: #{custom_bert_forward.1} parent=0 // pred_fallthru
    _
  // Predicated region
  $region6: #{custom_bert_forward.1} parent=0 // pred_check
    _
  $region7: #{custom_bert_forward.1} parent=0 // pred_check_branch
    %12 = sbr.rel (0) target = $region9
  $region8: #{custom_bert_forward.1} parent=0 // pred_region
    _
  $region9: #{custom_bert_forward.1} parent=0 // pred_fallthru
    _
  // Predicated region
  $region10: #{custom_bert_forward.1} parent=0 // pred_check
    _
  $region11: #{custom_bert_forward.1} parent=0 // pred_check_branch
    %14 = sbr.rel (0) target = $region13
  $region12: #{custom_bert_forward.1} parent=0 // pred_region
    _
  $region13: #{custom_bert_forward.1} parent=0 // pred_fallthru
    _
  // Predicated region
  $region14: #{custom_bert_forward.1} parent=0 // pred_check
    _
  $region15: #{custom_bert_forward.1} parent=0 // pred_check_branch
    %16 = sbr.rel (0) target = $region17
  $region16: #{custom_bert_forward.1} parent=0 // pred_region
    _
  $region17: #{custom_bert_forward.1} parent=0 // pred_fallthru
    _
  %v18 = vld [vmem:[%s3] sm:$0xf]
  %v19 = vld [vmem:[%s0] sm:$0xf]
  %v20 = vld [vmem:[%s1] sm:$0xf]
  %v21 = vld [vmem:[%s1 + $0x4] sm:$0xf]
  %v22 = vld [vmem:[%s1 + $0x8] sm:$0xf]
  %v23 = vld [vmem:[%s1 + $0xc] sm:$0xf]
  %v24 = vld [vmem:[%s1 + $0x10] sm:$0xf]
  %v25 = vld [vmem:[%s1 + $0x14] sm:$0xf]
  %v26 = vld [vmem:[%s1 + $0x18] sm:$0xf]
  %v27 = vld [vmem:[%s1 + $0x1c] sm:$0xf]
  %v28 = vld [vmem:[%s1 + $0x20] sm:$0xf]
  %v29 = vld [vmem:[%s1 + $0x24] sm:$0xf]
  %v30 = vld [vmem:[%s1 + $0x28] sm:$0xf]
  %v31 = vld [vmem:[%s1 + $0x2c] sm:$0xf]
  %v32 = vld [vmem:[%s1 + $0x30] sm:$0xf]
  %v33 = vld [vmem:[%s1 + $0x34] sm:$0xf]
  %v34 = vld [vmem:[%s1 + $0x38] sm:$0xf]
  %v35 = vld [vmem:[%s1 + $0x3c] sm:$0xf]
  %v36 = vlaneseq
  %v37 = vshrl.u32 %v36, 7
  %v38 = vsub.s32 0, %v37
  %v39 = vrot.slane %v18, %v38
  %v56 = vunpack.c.l.b16 %v20
  %v57 = vunpack.c.l.b16 %v21
  %v58 = vunpack.c.l.b16 %v22
  %v59 = vunpack.c.l.b16 %v23
  %v60 = vunpack.c.l.b16 %v24
  %v61 = vunpack.c.l.b16 %v25
  %v62 = vunpack.c.l.b16 %v26
  %v63 = vunpack.c.l.b16 %v27
  %v64 = vunpack.c.l.b16 %v28
  %v65 = vunpack.c.l.b16 %v29
  %v66 = vunpack.c.l.b16 %v30
  %v67 = vunpack.c.l.b16 %v31
  %v68 = vunpack.c.l.b16 %v32
  %v69 = vunpack.c.l.b16 %v33
  %v70 = vunpack.c.l.b16 %v34
  %v71 = vunpack.c.l.b16 %v35
  %v72 = vpack.c.b16 %v57, %v56
  %v73 = vpack.c.b16 %v59, %v58
  %v74 = vpack.c.b16 %v61, %v60
  %v75 = vpack.c.b16 %v63, %v62
  %v76 = vpack.c.b16 %v65, %v64
  %v77 = vpack.c.b16 %v67, %v66
  %v78 = vpack.c.b16 %v69, %v68
  %v79 = vpack.c.b16 %v71, %v70
  %88 = vmatprep.subr.bf16.mxu0 0
  %89 = vmatpush1.bf16.msra.mxu0 %v72
  %90 = vmatprep.subr.bf16.mxu0 0
  %91 = vmatpush1.bf16.msra.mxu0 %v73
  %92 = vmatprep.subr.bf16.mxu0 0
  %93 = vmatpush1.bf16.msra.mxu0 %v74
  %94 = vmatprep.subr.bf16.mxu0 0
  %95 = vmatpush1.bf16.msra.mxu0 %v75
  %96 = vmatprep.subr.bf16.mxu0 0
  %97 = vmatpush1.bf16.msra.mxu0 %v76
  %98 = vmatprep.subr.bf16.mxu0 0
  %99 = vmatpush1.bf16.msra.mxu0 %v77
  %100 = vmatprep.subr.bf16.mxu0 0
  %101 = vmatpush1.bf16.msra.mxu0 %v78
  %102 = vmatprep.subr.bf16.mxu0 0
  %103 = vmatpush1.bf16.msra.mxu0 %v79
  %104 = vmatprep.subr.bf16.mxu0 0
  %105 = vmatpush1.bf16.msra.mxu0 0
  %106 = vmatprep.subr.bf16.mxu0 0
  %107 = vmatpush1.bf16.msra.mxu0 0
  %108 = vmatprep.subr.bf16.mxu0 0
  %109 = vmatpush1.bf16.msra.mxu0 0
  %110 = vmatprep.subr.bf16.mxu0 0
  %111 = vmatpush1.bf16.msra.mxu0 0
  %112 = vmatprep.subr.bf16.mxu0 0
  %113 = vmatpush1.bf16.msra.mxu0 0
  %114 = vmatprep.subr.bf16.mxu0 0
  %115 = vmatpush1.bf16.msra.mxu0 0
  %116 = vmatprep.subr.bf16.mxu0 0
  %117 = vmatpush1.bf16.msra.mxu0 0
  %118 = vmatprep.subr.bf16.mxu0 0
  %119 = vmatpush1.bf16.msra.mxu0 0
  %120 = vmatprep.mubr.bf16.mxu0 0
  %121 = vmatmul.mubr.bf16.gmra.mrb[0].mxu0 %v19
  %v122 = vpop.f32.mrb[0].mxu0
  %v123 = vadd.f32 %v39, %v122
  %v124 = vpop.f32.mrb[0].mxu0
  %v125 = vpop.f32.mrb[0].mxu0
  %v126 = vpop.f32.mrb[0].mxu0
  %127 = vdwg.mxu0
  %v128 = vmax.f32 %v123, 0.0
  %v129 = vpack.c.bf16 %v128, %v128
  %v130 = vld [vmem:[%s2] sm:$0xf]
  %v131 = vld [vmem:[%s2 + $0x4] sm:$0xf]
  %v132 = vld [vmem:[%s2 + $0x8] sm:$0xf]
  %v133 = vld [vmem:[%s2 + $0xc] sm:$0xf]
  %v134 = vld [vmem:[%s2 + $0x10] sm:$0xf]
  %v135 = vld [vmem:[%s2 + $0x14] sm:$0xf]
  %v136 = vld [vmem:[%s2 + $0x18] sm:$0xf]
  %v137 = vld [vmem:[%s2 + $0x1c] sm:$0xf]
  %v138 = vld [vmem:[%s2 + $0x20] sm:$0xf]
  %v139 = vld [vmem:[%s2 + $0x24] sm:$0xf]
  %v140 = vld [vmem:[%s2 + $0x28] sm:$0xf]
  %v141 = vld [vmem:[%s2 + $0x2c] sm:$0xf]
  %v142 = vld [vmem:[%s2 + $0x30] sm:$0xf]
  %v143 = vld [vmem:[%s2 + $0x34] sm:$0xf]
  %v144 = vld [vmem:[%s2 + $0x38] sm:$0xf]
  %v145 = vld [vmem:[%s2 + $0x3c] sm:$0xf]
  %v146 = vlaneseq
  %v147 = vshrl.u32 %v146, 7
  %v148 = vsub.s32 1, %v147
  %v149 = vrot.slane %v18, %v148
  %v166 = vunpack.c.l.b16 %v130
  %v167 = vunpack.c.l.b16 %v131
  %v168 = vunpack.c.l.b16 %v132
  %v169 = vunpack.c.l.b16 %v133
  %v170 = vunpack.c.l.b16 %v134
  %v171 = vunpack.c.l.b16 %v135
  %v172 = vunpack.c.l.b16 %v136
  %v173 = vunpack.c.l.b16 %v137
  %v174 = vunpack.c.l.b16 %v138
  %v175 = vunpack.c.l.b16 %v139
  %v176 = vunpack.c.l.b16 %v140
  %v177 = vunpack.c.l.b16 %v141
  %v178 = vunpack.c.l.b16 %v142
  %v179 = vunpack.c.l.b16 %v143
  %v180 = vunpack.c.l.b16 %v144
  %v181 = vunpack.c.l.b16 %v145
  %v182 = vpack.c.b16 %v167, %v166
  %v183 = vpack.c.b16 %v169, %v168
  %v184 = vpack.c.b16 %v171, %v170
  %v185 = vpack.c.b16 %v173, %v172
  %v186 = vpack.c.b16 %v175, %v174
  %v187 = vpack.c.b16 %v177, %v176
  %v188 = vpack.c.b16 %v179, %v178
  %v189 = vpack.c.b16 %v181, %v180
  %198 = vmatprep.subr.bf16.mxu0 0
  %199 = vmatpush1.bf16.msra.mxu0 %v182
  %200 = vmatprep.subr.bf16.mxu0 0
  %201 = vmatpush1.bf16.msra.mxu0 %v183
  %202 = vmatprep.subr.bf16.mxu0 0
  %203 = vmatpush1.bf16.msra.mxu0 %v184
  %204 = vmatprep.subr.bf16.mxu0 0
  %205 = vmatpush1.bf16.msra.mxu0 %v185
  %206 = vmatprep.subr.bf16.mxu0 0
  %207 = vmatpush1.bf16.msra.mxu0 %v186
  %208 = vmatprep.subr.bf16.mxu0 0
  %209 = vmatpush1.bf16.msra.mxu0 %v187
  %210 = vmatprep.subr.bf16.mxu0 0
  %211 = vmatpush1.bf16.msra.mxu0 %v188
  %212 = vmatprep.subr.bf16.mxu0 0
  %213 = vmatpush1.bf16.msra.mxu0 %v189
  %214 = vmatprep.subr.bf16.mxu0 0
  %215 = vmatpush1.bf16.msra.mxu0 0
  %216 = vmatprep.subr.bf16.mxu0 0
  %217 = vmatpush1.bf16.msra.mxu0 0
  %218 = vmatprep.subr.bf16.mxu0 0
  %219 = vmatpush1.bf16.msra.mxu0 0
  %220 = vmatprep.subr.bf16.mxu0 0
  %221 = vmatpush1.bf16.msra.mxu0 0
  %222 = vmatprep.subr.bf16.mxu0 0
  %223 = vmatpush1.bf16.msra.mxu0 0
  %224 = vmatprep.subr.bf16.mxu0 0
  %225 = vmatpush1.bf16.msra.mxu0 0
  %226 = vmatprep.subr.bf16.mxu0 0
  %227 = vmatpush1.bf16.msra.mxu0 0
  %228 = vmatprep.subr.bf16.mxu0 0
  %229 = vmatpush1.bf16.msra.mxu0 0
  %230 = vmatprep.mubr.bf16.mxu0 0
  %231 = vmatmul.mubr.bf16.gmra.mrb[0].mxu0 %v129
  %v232 = vpop.f32.mrb[0].mxu0
  %v233 = vadd.f32 %v149, %v232
  %v234 = vpop.f32.mrb[0].mxu0
  %v235 = vpop.f32.mrb[0].mxu0
  %v236 = vpop.f32.mrb[0].mxu0
  %237 = vdwg.mxu0
  %v238 = vmax.f32 %v233, 0.0
  %v239 = vpack.c.bf16 %v238, %v238
  %s240 = scalar_lea.vmem %s2, 64
  %v241 = vld [vmem:[%s240] sm:$0xf]
  %v242 = vld [vmem:[%s240 + $0x4] sm:$0xf]
  %v243 = vld [vmem:[%s240 + $0x8] sm:$0xf]
  %v244 = vld [vmem:[%s240 + $0xc] sm:$0xf]
  %v245 = vld [vmem:[%s240 + $0x10] sm:$0xf]
  %v246 = vld [vmem:[%s240 + $0x14] sm:$0xf]
  %v247 = vld [vmem:[%s240 + $0x18] sm:$0xf]
  %v248 = vld [vmem:[%s240 + $0x1c] sm:$0xf]
  %v249 = vld [vmem:[%s240 + $0x20] sm:$0xf]
  %v250 = vld [vmem:[%s240 + $0x24] sm:$0xf]
  %v251 = vld [vmem:[%s240 + $0x28] sm:$0xf]
  %v252 = vld [vmem:[%s240 + $0x2c] sm:$0xf]
  %v253 = vld [vmem:[%s240 + $0x30] sm:$0xf]
  %v254 = vld [vmem:[%s240 + $0x34] sm:$0xf]
  %v255 = vld [vmem:[%s240 + $0x38] sm:$0xf]
  %v256 = vld [vmem:[%s240 + $0x3c] sm:$0xf]
  %v257 = vlaneseq
  %v258 = vshrl.u32 %v257, 7
  %v259 = vsub.s32 2, %v258
  %v260 = vrot.slane %v18, %v259
  %v277 = vunpack.c.l.b16 %v241
  %v278 = vunpack.c.l.b16 %v242
  %v279 = vunpack.c.l.b16 %v243
  %v280 = vunpack.c.l.b16 %v244
  %v281 = vunpack.c.l.b16 %v245
  %v282 = vunpack.c.l.b16 %v246
  %v283 = vunpack.c.l.b16 %v247
  %v284 = vunpack.c.l.b16 %v248
  %v285 = vunpack.c.l.b16 %v249
  %v286 = vunpack.c.l.b16 %v250
  %v287 = vunpack.c.l.b16 %v251
  %v288 = vunpack.c.l.b16 %v252
  %v289 = vunpack.c.l.b16 %v253
  %v290 = vunpack.c.l.b16 %v254
  %v291 = vunpack.c.l.b16 %v255
  %v292 = vunpack.c.l.b16 %v256
  %v293 = vpack.c.b16 %v278, %v277
  %v294 = vpack.c.b16 %v280, %v279
  %v295 = vpack.c.b16 %v282, %v281
  %v296 = vpack.c.b16 %v284, %v283
  %v297 = vpack.c.b16 %v286, %v285
  %v298 = vpack.c.b16 %v288, %v287
  %v299 = vpack.c.b16 %v290, %v289
  %v300 = vpack.c.b16 %v292, %v291
  %309 = vmatprep.subr.bf16.mxu0 0
  %310 = vmatpush1.bf16.msra.mxu0 %v293
  %311 = vmatprep.subr.bf16.mxu0 0
  %312 = vmatpush1.bf16.msra.mxu0 %v294
  %313 = vmatprep.subr.bf16.mxu0 0
  %314 = vmatpush1.bf16.msra.mxu0 %v295
  %315 = vmatprep.subr.bf16.mxu0 0
  %316 = vmatpush1.bf16.msra.mxu0 %v296
  %317 = vmatprep.subr.bf16.mxu0 0
  %318 = vmatpush1.bf16.msra.mxu0 %v297
  %319 = vmatprep.subr.bf16.mxu0 0
  %320 = vmatpush1.bf16.msra.mxu0 %v298
  %321 = vmatprep.subr.bf16.mxu0 0
  %322 = vmatpush1.bf16.msra.mxu0 %v299
  %323 = vmatprep.subr.bf16.mxu0 0
  %324 = vmatpush1.bf16.msra.mxu0 %v300
  %325 = vmatprep.subr.bf16.mxu0 0
  %326 = vmatpush1.bf16.msra.mxu0 0
  %327 = vmatprep.subr.bf16.mxu0 0
  %328 = vmatpush1.bf16.msra.mxu0 0
  %329 = vmatprep.subr.bf16.mxu0 0
  %330 = vmatpush1.bf16.msra.mxu0 0
  %331 = vmatprep.subr.bf16.mxu0 0
  %332 = vmatpush1.bf16.msra.mxu0 0
  %333 = vmatprep.subr.bf16.mxu0 0
  %334 = vmatpush1.bf16.msra.mxu0 0
  %335 = vmatprep.subr.bf16.mxu0 0
  %336 = vmatpush1.bf16.msra.mxu0 0
  %337 = vmatprep.subr.bf16.mxu0 0
  %338 = vmatpush1.bf16.msra.mxu0 0
  %339 = vmatprep.subr.bf16.mxu0 0
  %340 = vmatpush1.bf16.msra.mxu0 0
  %341 = vmatprep.mubr.bf16.mxu0 0
  %342 = vmatmul.mubr.bf16.gmra.mrb[0].mxu0 %v239
  %v343 = vpop.f32.mrb[0].mxu0
  %v344 = vadd.f32 %v260, %v343
  %v345 = vpop.f32.mrb[0].mxu0
  %v346 = vpop.f32.mrb[0].mxu0
  %v347 = vpop.f32.mrb[0].mxu0
  %348 = vdwg.mxu0
  %v349 = vmax.f32 %v344, 0.0
  %v350 = vpack.c.bf16 %v349, %v349
  %s351 = scalar_lea.vmem %s2, 128
  %v352 = vld [vmem:[%s351] sm:$0xf]
  %v353 = vld [vmem:[%s351 + $0x4] sm:$0xf]
  %v354 = vld [vmem:[%s351 + $0x8] sm:$0xf]
  %v355 = vld [vmem:[%s351 + $0xc] sm:$0xf]
  %v356 = vld [vmem:[%s351 + $0x10] sm:$0xf]
  %v357 = vld [vmem:[%s351 + $0x14] sm:$0xf]
  %v358 = vld [vmem:[%s351 + $0x18] sm:$0xf]
  %v359 = vld [vmem:[%s351 + $0x1c] sm:$0xf]
  %v360 = vld [vmem:[%s351 + $0x20] sm:$0xf]
  %v361 = vld [vmem:[%s351 + $0x24] sm:$0xf]
  %v362 = vld [vmem:[%s351 + $0x28] sm:$0xf]
  %v363 = vld [vmem:[%s351 + $0x2c] sm:$0xf]
  %v364 = vld [vmem:[%s351 + $0x30] sm:$0xf]
  %v365 = vld [vmem:[%s351 + $0x34] sm:$0xf]
  %v366 = vld [vmem:[%s351 + $0x38] sm:$0xf]
  %v367 = vld [vmem:[%s351 + $0x3c] sm:$0xf]
  %v368 = vlaneseq
  %v369 = vshrl.u32 %v368, 7
  %v370 = vsub.s32 3, %v369
  %v371 = vrot.slane %v18, %v370
  %v388 = vunpack.c.l.b16 %v352
  %v389 = vunpack.c.l.b16 %v353
  %v390 = vunpack.c.l.b16 %v354
  %v391 = vunpack.c.l.b16 %v355
  %v392 = vunpack.c.l.b16 %v356
  %v393 = vunpack.c.l.b16 %v357
  %v394 = vunpack.c.l.b16 %v358
  %v395 = vunpack.c.l.b16 %v359
  %v396 = vunpack.c.l.b16 %v360
  %v397 = vunpack.c.l.b16 %v361
  %v398 = vunpack.c.l.b16 %v362
  %v399 = vunpack.c.l.b16 %v363
  %v400 = vunpack.c.l.b16 %v364
  %v401 = vunpack.c.l.b16 %v365
  %v402 = vunpack.c.l.b16 %v366
  %v403 = vunpack.c.l.b16 %v367
  %v404 = vpack.c.b16 %v389, %v388
  %v405 = vpack.c.b16 %v391, %v390
  %v406 = vpack.c.b16 %v393, %v392
  %v407 = vpack.c.b16 %v395, %v394
  %v408 = vpack.c.b16 %v397, %v396
  %v409 = vpack.c.b16 %v399, %v398
  %v410 = vpack.c.b16 %v401, %v400
  %v411 = vpack.c.b16 %v403, %v402
  %420 = vmatprep.subr.bf16.mxu0 0
  %421 = vmatpush1.bf16.msra.mxu0 %v404
  %422 = vmatprep.subr.bf16.mxu0 0
  %423 = vmatpush1.bf16.msra.mxu0 %v405
  %424 = vmatprep.subr.bf16.mxu0 0
  %425 = vmatpush1.bf16.msra.mxu0 %v406
  %426 = vmatprep.subr.bf16.mxu0 0
  %427 = vmatpush1.bf16.msra.mxu0 %v407
  %428 = vmatprep.subr.bf16.mxu0 0
  %429 = vmatpush1.bf16.msra.mxu0 %v408
  %430 = vmatprep.subr.bf16.mxu0 0
  %431 = vmatpush1.bf16.msra.mxu0 %v409
  %432 = vmatprep.subr.bf16.mxu0 0
  %433 = vmatpush1.bf16.msra.mxu0 %v410
  %434 = vmatprep.subr.bf16.mxu0 0
  %435 = vmatpush1.bf16.msra.mxu0 %v411
  %436 = vmatprep.subr.bf16.mxu0 0
  %437 = vmatpush1.bf16.msra.mxu0 0
  %438 = vmatprep.subr.bf16.mxu0 0
  %439 = vmatpush1.bf16.msra.mxu0 0
  %440 = vmatprep.subr.bf16.mxu0 0
  %441 = vmatpush1.bf16.msra.mxu0 0
  %442 = vmatprep.subr.bf16.mxu0 0
  %443 = vmatpush1.bf16.msra.mxu0 0
  %444 = vmatprep.subr.bf16.mxu0 0
  %445 = vmatpush1.bf16.msra.mxu0 0
  %446 = vmatprep.subr.bf16.mxu0 0
  %447 = vmatpush1.bf16.msra.mxu0 0
  %448 = vmatprep.subr.bf16.mxu0 0
  %449 = vmatpush1.bf16.msra.mxu0 0
  %450 = vmatprep.subr.bf16.mxu0 0
  %451 = vmatpush1.bf16.msra.mxu0 0
  %452 = vmatprep.mubr.bf16.mxu0 0
  %453 = vmatmul.mubr.bf16.gmra.mrb[0].mxu0 %v350
  %v454 = vpop.f32.mrb[0].mxu0
  %v455 = vadd.f32 %v371, %v454
  %v456 = vpop.f32.mrb[0].mxu0
  %v457 = vpop.f32.mrb[0].mxu0
  %v458 = vpop.f32.mrb[0].mxu0
  %459 = vdwg.mxu0
  %vm460 = vcmask 15360
  %461 = vst.msk [vmem:[%s4] sm:$0xff] %vm460, %v455
  // Predicated region
  $region18: #{custom_bert_forward.1} parent=0 // pred_check
    _
  $region19: #{custom_bert_forward.1} parent=0 // pred_check_branch
    %463 = sbr.rel (0) target = $region21
  $region20: #{custom_bert_forward.1} parent=0 // pred_region
    _
  $region21: #{custom_bert_forward.1} parent=0 // pred_fallthru
    _
  // Predicated region
  $region22: #{custom_bert_forward.1} parent=0 // pred_check
    _
  $region23: #{custom_bert_forward.1} parent=0 // pred_check_branch
    %465 = sbr.rel (0) target = $region25
  $region24: #{custom_bert_forward.1} parent=0 // pred_region
    _
  $region25: #{custom_bert_forward.1} parent=0 // pred_fallthru
    _

</llo_original>
